<compile_context>
chip_gen: v5e
topology: v5e:2x2
jax: 0.10.0
libtpu: 0.0.40
codegen_flags: <defaults>
</compile_context>

<pallas_src>
import jax
import jax.numpy as jnp
from jax.experimental import pallas as pl
from jax.experimental.pallas import tpu as pltpu


# ---------------------------------------------------------------------------
# Fused GRU + MLP-head kernel (one invocation does the whole forward pass)
# ---------------------------------------------------------------------------
def _gru_mlp_kernel(x_ref,          # (B, T, I)
                    wi_ref,         # (I, 3H)  columns = [W_ir | W_iz | W_in]
                    wh_ref,         # (H, 3H)  columns = [W_hr | W_hz | W_hn]
                    bi_ref,         # (1, 3H)  [b_ir | b_iz | b_in]
                    bh_ref,         # (1, 3H)  [b_hr | b_hz | b_hn]
                    w1_ref, b1_ref,  # (H, D1), (1, D1)
                    w2_ref, b2_ref,  # (D1, D2), (1, D2)
                    out_ref):       # (B, D2)
    B, T, I = x_ref.shape
    H = wh_ref.shape[0]

    wi = wi_ref[...]
    wh = wh_ref[...]
    # Hoist bias broadcasts out of the unrolled time loop (JAX does not CSE
    # broadcast_in_dim, so doing this per step would emit T redundant VPU ops).
    bi = jnp.broadcast_to(bi_ref[...], (B, 3 * H))
    bh = jnp.broadcast_to(bh_ref[...], (B, 3 * H))

    # PyTorch GRU cell (gate order r, z, n), h0 = 0:
    #   r = sigmoid(W_ir x + b_ir + W_hr h + b_hr)
    #   z = sigmoid(W_iz x + b_iz + W_hz h + b_hz)
    #   n = tanh   (W_in x + b_in + r * (W_hn h + b_hn))
    #   h' = (1 - z) * n + z * h
    h = jnp.zeros((B, H), jnp.float32)

    # T is a trace-time constant -> fully unrolled straight-line code with
    # static time-slices; the LLO scheduler sees across all timesteps.
    for t in range(T):
        x_t = x_ref[:, t, :]                                       # (B, I), static slice
        gx = jnp.dot(x_t, wi, preferred_element_type=jnp.float32) + bi   # (B, 3H)
        gh = jnp.dot(h, wh, preferred_element_type=jnp.float32) + bh     # (B, 3H)

        r = jax.nn.sigmoid(gx[:, 0:H] + gh[:, 0:H])
        z = jax.nn.sigmoid(gx[:, H:2 * H] + gh[:, H:2 * H])
        n = jnp.tanh(gx[:, 2 * H:3 * H] + r * gh[:, 2 * H:3 * H])
        h = (1.0 - z) * n + z * h

    # MLP head fused into the same kernel: relu -> Linear -> tanh -> Linear.
    h = jnp.maximum(h, 0.0)
    y = jnp.tanh(jnp.dot(h, w1_ref[...], preferred_element_type=jnp.float32)
                 + b1_ref[...])
    out_ref[...] = (jnp.dot(y, w2_ref[...], preferred_element_type=jnp.float32)
                    + b2_ref[...])


# ---------------------------------------------------------------------------
# Wrapper
# ---------------------------------------------------------------------------
def mlp_forward(x, params):
    """x: (B, T, I) float32 -> (B, sizes[-1]) float32."""
    B, T, I = x.shape
    H = params["wh"].shape[0]
    D1 = params["w1"].shape[1]
    D2 = params["w2"].shape[1]

    def full(shape):
        # Whole-array block (block shape == array shape satisfies the (8,128)
        # rule), constant index map -> operand is resident in VMEM for the
        # single grid step (no per-operand double-buffering churn).
        return pl.BlockSpec(shape, lambda *_: (0,) * len(shape))

    return pl.pallas_call(
        _gru_mlp_kernel,
        out_shape=jax.ShapeDtypeStruct((B, D2), jnp.float32),
        grid_spec=pltpu.PrefetchScalarGridSpec(
            num_scalar_prefetch=0,
            grid=(1,),
            in_specs=[
                full((B, T, I)),
                full((I, 3 * H)), full((H, 3 * H)),
                full((1, 3 * H)), full((1, 3 * H)),
                full((H, D1)), full((1, D1)),
                full((D1, D2)), full((1, D2)),
            ],
            out_specs=full((B, D2)),
        ),
        compiler_params=pltpu.CompilerParams(
            dimension_semantics=("arbitrary",)),
        # TODO(synk): for production sizes (large B) on v7x, add a leading
        # parallel batch grid axis so both TensorCores run independent batch
        # slices of the recurrence.
    )(x,
      params["wi"], params["wh"], params["bi"], params["bh"],
      params["w1"], params["b1"], params["w2"], params["b2"])


# ---------------------------------------------------------------------------
# Deterministic parameter init (PyTorch-style uniform bounds), sizes=[I,H,D1,D2]
# Gate weights/biases are packed as [r | z | n] along the output axis.
# ---------------------------------------------------------------------------
def init_params(key, sizes):
    I, H, D1, D2 = sizes
    ks = jax.random.split(key, 12)

    def u(k, shape, bound):
        return jax.random.uniform(k, shape, jnp.float32, -bound, bound)

    kg = 1.0 / float(H) ** 0.5
    k1 = 1.0 / float(H) ** 0.5
    k2 = 1.0 / float(D1) ** 0.5
    params = {
        "wi": jnp.concatenate(
            [u(ks[0], (I, H), kg), u(ks[1], (I, H), kg), u(ks[2], (I, H), kg)],
            axis=1),                                        # (I, 3H)
        "wh": jnp.concatenate(
            [u(ks[3], (H, H), kg), u(ks[4], (H, H), kg), u(ks[5], (H, H), kg)],
            axis=1),                                        # (H, 3H)
        "bi": u(ks[6], (1, 3 * H), kg),                     # [b_ir | b_iz | b_in]
        "bh": u(ks[7], (1, 3 * H), kg),                     # [b_hr | b_hz | b_hn]
        "w1": u(ks[8], (H, D1), k1),
        "b1": u(ks[9], (1, D1), k1),
        "w2": u(ks[10], (D1, D2), k2),
        "b2": u(ks[11], (1, D2), k2),
    }
    return params


# Pure-JAX reference (same math) used to sanity-check the Pallas kernel.
def reference_forward(x, params):
    B, T, I = x.shape
    H = params["wh"].shape[0]
    wi, wh, bi, bh = params["wi"], params["wh"], params["bi"], params["bh"]
    h = jnp.zeros((B, H), jnp.float32)
    for t in range(T):
        x_t = x[:, t, :]
        gx = x_t @ wi + bi
        gh = h @ wh + bh
        r = jax.nn.sigmoid(gx[:, 0:H] + gh[:, 0:H])
        z = jax.nn.sigmoid(gx[:, H:2 * H] + gh[:, H:2 * H])
        n = jnp.tanh(gx[:, 2 * H:3 * H] + r * gh[:, 2 * H:3 * H])
        h = (1.0 - z) * n + z * h
    h = jnp.maximum(h, 0.0)
    y = jnp.tanh(h @ params["w1"] + params["b1"])
    return y @ params["w2"] + params["b2"]


if __name__ == "__main__":
    key = jax.random.PRNGKey(0)
    sizes = [32, 32, 32, 16]   # [obs_dim, gru_hidden, mlp_hidden, out_dim]
    B, T = 2, 8

    kx, kp = jax.random.split(key)
    x = jax.random.normal(kx, (B, T, sizes[0]), jnp.float32)
    params = init_params(kp, sizes)

    out = jax.block_until_ready(mlp_forward(x, params))
    ref = jax.block_until_ready(reference_forward(x, params))

    assert out.shape == (B, sizes[-1]), out.shape
    assert jnp.allclose(out, ref, rtol=1e-5, atol=1e-5), "mismatch vs JAX reference"
    print("KERNEL_OK")
</pallas_src>

<mosaic_0001>
module attributes {stable_mosaic.version = 11 : i64} {
  func.func @_gru_mlp_kernel(%arg0: i32, %arg1: memref<2x8x32xf32, #tpu.memory_space<vmem>>, %arg2: memref<32x96xf32, #tpu.memory_space<vmem>>, %arg3: memref<32x96xf32, #tpu.memory_space<vmem>>, %arg4: memref<1x96xf32, #tpu.memory_space<vmem>>, %arg5: memref<1x96xf32, #tpu.memory_space<vmem>>, %arg6: memref<32x32xf32, #tpu.memory_space<vmem>>, %arg7: memref<1x32xf32, #tpu.memory_space<vmem>>, %arg8: memref<32x16xf32, #tpu.memory_space<vmem>>, %arg9: memref<1x16xf32, #tpu.memory_space<vmem>>, %arg10: memref<2x16xf32, #tpu.memory_space<vmem>>) attributes {dimension_semantics = [#tpu.dimension_semantics<arbitrary>], iteration_bounds = array<i64: 1>, scalar_prefetch = 0 : i64, scratch_operands = 0 : i64, tpu.core_type = #tpu.core_type<tc>, window_params = [{pipeline_mode = #tpu.pipeline_mode<synchronous>, transform_indices = @transform_0, window_bounds = array<i64: 2, 8, 32>}, {pipeline_mode = #tpu.pipeline_mode<synchronous>, transform_indices = @transform_1, window_bounds = array<i64: 32, 96>}, {pipeline_mode = #tpu.pipeline_mode<synchronous>, transform_indices = @transform_2, window_bounds = array<i64: 32, 96>}, {pipeline_mode = #tpu.pipeline_mode<synchronous>, transform_indices = @transform_3, window_bounds = array<i64: 1, 96>}, {pipeline_mode = #tpu.pipeline_mode<synchronous>, transform_indices = @transform_4, window_bounds = array<i64: 1, 96>}, {pipeline_mode = #tpu.pipeline_mode<synchronous>, transform_indices = @transform_5, window_bounds = array<i64: 32, 32>}, {pipeline_mode = #tpu.pipeline_mode<synchronous>, transform_indices = @transform_6, window_bounds = array<i64: 1, 32>}, {pipeline_mode = #tpu.pipeline_mode<synchronous>, transform_indices = @transform_7, window_bounds = array<i64: 32, 16>}, {pipeline_mode = #tpu.pipeline_mode<synchronous>, transform_indices = @transform_8, window_bounds = array<i64: 1, 16>}, {pipeline_mode = #tpu.pipeline_mode<synchronous>, transform_indices = @transform_9, window_bounds = array<i64: 2, 16>}]} {
    %c0 = arith.constant 0 : index
    %c0_0 = arith.constant 0 : index
    %0 = vector.load %arg2[%c0, %c0_0] : memref<32x96xf32, #tpu.memory_space<vmem>>, vector<32x96xf32>
    %c0_1 = arith.constant 0 : index
    %c0_2 = arith.constant 0 : index
    %1 = vector.load %arg3[%c0_1, %c0_2] : memref<32x96xf32, #tpu.memory_space<vmem>>, vector<32x96xf32>
    %c0_3 = arith.constant 0 : index
    %c0_4 = arith.constant 0 : index
    %2 = vector.load %arg4[%c0_3, %c0_4] : memref<1x96xf32, #tpu.memory_space<vmem>>, vector<1x96xf32>
    %3 = vector.shape_cast %2 : vector<1x96xf32> to vector<1x96xf32>
    %4 = vector.broadcast %3 : vector<1x96xf32> to vector<2x96xf32>
    %c0_5 = arith.constant 0 : index
    %c0_6 = arith.constant 0 : index
    %5 = vector.load %arg5[%c0_5, %c0_6] : memref<1x96xf32, #tpu.memory_space<vmem>>, vector<1x96xf32>
    %6 = vector.shape_cast %5 : vector<1x96xf32> to vector<1x96xf32>
    %7 = vector.broadcast %6 : vector<1x96xf32> to vector<2x96xf32>
    %cst = arith.constant 0.000000e+00 : f32
    %8 = vector.broadcast %cst : f32 to vector<2x32xf32>
    %c0_7 = arith.constant 0 : index
    %c0_8 = arith.constant 0 : index
    %c0_9 = arith.constant 0 : index
    %9 = vector.load %arg1[%c0_7, %c0_8, %c0_9] : memref<2x8x32xf32, #tpu.memory_space<vmem>>, vector<2x1x32xf32>
    %10 = vector.shape_cast %9 : vector<2x1x32xf32> to vector<2x32xf32>
    %cst_10 = arith.constant dense<0.000000e+00> : vector<2x96xf32>
    %11 = tpu.matmul %10, %0, %cst_10 {dimension_numbers = #tpu.dot_dimension_numbers<[1], [0], [0], [1], [0, 0, 1, 1], [], []>} : vector<2x32xf32>, vector<32x96xf32>, vector<2x96xf32> -> vector<2x96xf32>
    %12 = arith.addf %11, %4 : vector<2x96xf32>
    %cst_11 = arith.constant dense<0.000000e+00> : vector<2x96xf32>
    %13 = tpu.matmul %8, %1, %cst_11 {dimension_numbers = #tpu.dot_dimension_numbers<[1], [0], [0], [1], [0, 0, 1, 1], [], []>} : vector<2x32xf32>, vector<32x96xf32>, vector<2x96xf32> -> vector<2x96xf32>
    %14 = arith.addf %13, %7 : vector<2x96xf32>
    %15 = vector.extract_strided_slice %12 {offsets = [0, 0], sizes = [2, 32], strides = [1, 1]} : vector<2x96xf32> to vector<2x32xf32>
    %16 = vector.extract_strided_slice %14 {offsets = [0, 0], sizes = [2, 32], strides = [1, 1]} : vector<2x96xf32> to vector<2x32xf32>
    %17 = arith.addf %15, %16 : vector<2x32xf32>
    %18 = arith.negf %17 : vector<2x32xf32>
    %19 = math.exp %18 : vector<2x32xf32>
    %cst_12 = arith.constant 1.000000e+00 : f32
    %20 = vector.broadcast %cst_12 : f32 to vector<2x32xf32>
    %21 = arith.addf %20, %19 : vector<2x32xf32>
    %22 = arith.divf %20, %21 : vector<2x32xf32>
    %23 = vector.extract_strided_slice %12 {offsets = [0, 32], sizes = [2, 32], strides = [1, 1]} : vector<2x96xf32> to vector<2x32xf32>
    %24 = vector.extract_strided_slice %14 {offsets = [0, 32], sizes = [2, 32], strides = [1, 1]} : vector<2x96xf32> to vector<2x32xf32>
    %25 = arith.addf %23, %24 : vector<2x32xf32>
    %26 = arith.negf %25 : vector<2x32xf32>
    %27 = math.exp %26 : vector<2x32xf32>
    %cst_13 = arith.constant 1.000000e+00 : f32
    %28 = vector.broadcast %cst_13 : f32 to vector<2x32xf32>
    %29 = arith.addf %28, %27 : vector<2x32xf32>
    %30 = arith.divf %28, %29 : vector<2x32xf32>
    %31 = vector.extract_strided_slice %12 {offsets = [0, 64], sizes = [2, 32], strides = [1, 1]} : vector<2x96xf32> to vector<2x32xf32>
    %32 = vector.extract_strided_slice %14 {offsets = [0, 64], sizes = [2, 32], strides = [1, 1]} : vector<2x96xf32> to vector<2x32xf32>
    %33 = arith.mulf %22, %32 : vector<2x32xf32>
    %34 = arith.addf %31, %33 : vector<2x32xf32>
    %35 = math.tanh %34 : vector<2x32xf32>
    %cst_14 = arith.constant 1.000000e+00 : f32
    %36 = vector.broadcast %cst_14 : f32 to vector<2x32xf32>
    %37 = arith.subf %36, %30 : vector<2x32xf32>
    %38 = arith.mulf %37, %35 : vector<2x32xf32>
    %39 = arith.mulf %30, %8 : vector<2x32xf32>
    %40 = arith.addf %38, %39 : vector<2x32xf32>
    %c0_15 = arith.constant 0 : index
    %c1 = arith.constant 1 : index
    %c0_16 = arith.constant 0 : index
    %41 = vector.load %arg1[%c0_15, %c1, %c0_16] : memref<2x8x32xf32, #tpu.memory_space<vmem>>, vector<2x1x32xf32>
    %42 = vector.shape_cast %41 : vector<2x1x32xf32> to vector<2x32xf32>
    %cst_17 = arith.constant dense<0.000000e+00> : vector<2x96xf32>
    %43 = tpu.matmul %42, %0, %cst_17 {dimension_numbers = #tpu.dot_dimension_numbers<[1], [0], [0], [1], [0, 0, 1, 1], [], []>} : vector<2x32xf32>, vector<32x96xf32>, vector<2x96xf32> -> vector<2x96xf32>
    %44 = arith.addf %43, %4 : vector<2x96xf32>
    %cst_18 = arith.constant dense<0.000000e+00> : vector<2x96xf32>
    %45 = tpu.matmul %40, %1, %cst_18 {dimension_numbers = #tpu.dot_dimension_numbers<[1], [0], [0], [1], [0, 0, 1, 1], [], []>} : vector<2x32xf32>, vector<32x96xf32>, vector<2x96xf32> -> vector<2x96xf32>
    %46 = arith.addf %45, %7 : vector<2x96xf32>
    %47 = vector.extract_strided_slice %44 {offsets = [0, 0], sizes = [2, 32], strides = [1, 1]} : vector<2x96xf32> to vector<2x32xf32>
    %48 = vector.extract_strided_slice %46 {offsets = [0, 0], sizes = [2, 32], strides = [1, 1]} : vector<2x96xf32> to vector<2x32xf32>
    %49 = arith.addf %47, %48 : vector<2x32xf32>
    %50 = arith.negf %49 : vector<2x32xf32>
    %51 = math.exp %50 : vector<2x32xf32>
    %cst_19 = arith.constant 1.000000e+00 : f32
    %52 = vector.broadcast %cst_19 : f32 to vector<2x32xf32>
    %53 = arith.addf %52, %51 : vector<2x32xf32>
    %54 = arith.divf %52, %53 : vector<2x32xf32>
    %55 = vector.extract_strided_slice %44 {offsets = [0, 32], sizes = [2, 32], strides = [1, 1]} : vector<2x96xf32> to vector<2x32xf32>
    %56 = vector.extract_strided_slice %46 {offsets = [0, 32], sizes = [2, 32], strides = [1, 1]} : vector<2x96xf32> to vector<2x32xf32>
    %57 = arith.addf %55, %56 : vector<2x32xf32>
    %58 = arith.negf %57 : vector<2x32xf32>
    %59 = math.exp %58 : vector<2x32xf32>
    %cst_20 = arith.constant 1.000000e+00 : f32
    %60 = vector.broadcast %cst_20 : f32 to vector<2x32xf32>
    %61 = arith.addf %60, %59 : vector<2x32xf32>
    %62 = arith.divf %60, %61 : vector<2x32xf32>
    %63 = vector.extract_strided_slice %44 {offsets = [0, 64], sizes = [2, 32], strides = [1, 1]} : vector<2x96xf32> to vector<2x32xf32>
    %64 = vector.extract_strided_slice %46 {offsets = [0, 64], sizes = [2, 32], strides = [1, 1]} : vector<2x96xf32> to vector<2x32xf32>
    %65 = arith.mulf %54, %64 : vector<2x32xf32>
    %66 = arith.addf %63, %65 : vector<2x32xf32>
    %67 = math.tanh %66 : vector<2x32xf32>
    %cst_21 = arith.constant 1.000000e+00 : f32
    %68 = vector.broadcast %cst_21 : f32 to vector<2x32xf32>
    %69 = arith.subf %68, %62 : vector<2x32xf32>
    %70 = arith.mulf %69, %67 : vector<2x32xf32>
    %71 = arith.mulf %62, %40 : vector<2x32xf32>
    %72 = arith.addf %70, %71 : vector<2x32xf32>
    %c0_22 = arith.constant 0 : index
    %c2 = arith.constant 2 : index
    %c0_23 = arith.constant 0 : index
    %73 = vector.load %arg1[%c0_22, %c2, %c0_23] : memref<2x8x32xf32, #tpu.memory_space<vmem>>, vector<2x1x32xf32>
    %74 = vector.shape_cast %73 : vector<2x1x32xf32> to vector<2x32xf32>
    %cst_24 = arith.constant dense<0.000000e+00> : vector<2x96xf32>
    %75 = tpu.matmul %74, %0, %cst_24 {dimension_numbers = #tpu.dot_dimension_numbers<[1], [0], [0], [1], [0, 0, 1, 1], [], []>} : vector<2x32xf32>, vector<32x96xf32>, vector<2x96xf32> -> vector<2x96xf32>
    %76 = arith.addf %75, %4 : vector<2x96xf32>
    %cst_25 = arith.constant dense<0.000000e+00> : vector<2x96xf32>
    %77 = tpu.matmul %72, %1, %cst_25 {dimension_numbers = #tpu.dot_dimension_numbers<[1], [0], [0], [1], [0, 0, 1, 1], [], []>} : vector<2x32xf32>, vector<32x96xf32>, vector<2x96xf32> -> vector<2x96xf32>
    %78 = arith.addf %77, %7 : vector<2x96xf32>
    %79 = vector.extract_strided_slice %76 {offsets = [0, 0], sizes = [2, 32], strides = [1, 1]} : vector<2x96xf32> to vector<2x32xf32>
    %80 = vector.extract_strided_slice %78 {offsets = [0, 0], sizes = [2, 32], strides = [1, 1]} : vector<2x96xf32> to vector<2x32xf32>
    %81 = arith.addf %79, %80 : vector<2x32xf32>
    %82 = arith.negf %81 : vector<2x32xf32>
    %83 = math.exp %82 : vector<2x32xf32>
    %cst_26 = arith.constant 1.000000e+00 : f32
    %84 = vector.broadcast %cst_26 : f32 to vector<2x32xf32>
    %85 = arith.addf %84, %83 : vector<2x32xf32>
    %86 = arith.divf %84, %85 : vector<2x32xf32>
    %87 = vector.extract_strided_slice %76 {offsets = [0, 32], sizes = [2, 32], strides = [1, 1]} : vector<2x96xf32> to vector<2x32xf32>
    %88 = vector.extract_strided_slice %78 {offsets = [0, 32], sizes = [2, 32], strides = [1, 1]} : vector<2x96xf32> to vector<2x32xf32>
    %89 = arith.addf %87, %88 : vector<2x32xf32>
    %90 = arith.negf %89 : vector<2x32xf32>
    %91 = math.exp %90 : vector<2x32xf32>
    %cst_27 = arith.constant 1.000000e+00 : f32
    %92 = vector.broadcast %cst_27 : f32 to vector<2x32xf32>
    %93 = arith.addf %92, %91 : vector<2x32xf32>
    %94 = arith.divf %92, %93 : vector<2x32xf32>
    %95 = vector.extract_strided_slice %76 {offsets = [0, 64], sizes = [2, 32], strides = [1, 1]} : vector<2x96xf32> to vector<2x32xf32>
    %96 = vector.extract_strided_slice %78 {offsets = [0, 64], sizes = [2, 32], strides = [1, 1]} : vector<2x96xf32> to vector<2x32xf32>
    %97 = arith.mulf %86, %96 : vector<2x32xf32>
    %98 = arith.addf %95, %97 : vector<2x32xf32>
    %99 = math.tanh %98 : vector<2x32xf32>
    %cst_28 = arith.constant 1.000000e+00 : f32
    %100 = vector.broadcast %cst_28 : f32 to vector<2x32xf32>
    %101 = arith.subf %100, %94 : vector<2x32xf32>
    %102 = arith.mulf %101, %99 : vector<2x32xf32>
    %103 = arith.mulf %94, %72 : vector<2x32xf32>
    %104 = arith.addf %102, %103 : vector<2x32xf32>
    %c0_29 = arith.constant 0 : index
    %c3 = arith.constant 3 : index
    %c0_30 = arith.constant 0 : index
    %105 = vector.load %arg1[%c0_29, %c3, %c0_30] : memref<2x8x32xf32, #tpu.memory_space<vmem>>, vector<2x1x32xf32>
    %106 = vector.shape_cast %105 : vector<2x1x32xf32> to vector<2x32xf32>
    %cst_31 = arith.constant dense<0.000000e+00> : vector<2x96xf32>
    %107 = tpu.matmul %106, %0, %cst_31 {dimension_numbers = #tpu.dot_dimension_numbers<[1], [0], [0], [1], [0, 0, 1, 1], [], []>} : vector<2x32xf32>, vector<32x96xf32>, vector<2x96xf32> -> vector<2x96xf32>
    %108 = arith.addf %107, %4 : vector<2x96xf32>
    %cst_32 = arith.constant dense<0.000000e+00> : vector<2x96xf32>
    %109 = tpu.matmul %104, %1, %cst_32 {dimension_numbers = #tpu.dot_dimension_numbers<[1], [0], [0], [1], [0, 0, 1, 1], [], []>} : vector<2x32xf32>, vector<32x96xf32>, vector<2x96xf32> -> vector<2x96xf32>
    %110 = arith.addf %109, %7 : vector<2x96xf32>
    %111 = vector.extract_strided_slice %108 {offsets = [0, 0], sizes = [2, 32], strides = [1, 1]} : vector<2x96xf32> to vector<2x32xf32>
    %112 = vector.extract_strided_slice %110 {offsets = [0, 0], sizes = [2, 32], strides = [1, 1]} : vector<2x96xf32> to vector<2x32xf32>
    %113 = arith.addf %111, %112 : vector<2x32xf32>
    %114 = arith.negf %113 : vector<2x32xf32>
    %115 = math.exp %114 : vector<2x32xf32>
    %cst_33 = arith.constant 1.000000e+00 : f32
    %116 = vector.broadcast %cst_33 : f32 to vector<2x32xf32>
    %117 = arith.addf %116, %115 : vector<2x32xf32>
    %118 = arith.divf %116, %117 : vector<2x32xf32>
    %119 = vector.extract_strided_slice %108 {offsets = [0, 32], sizes = [2, 32], strides = [1, 1]} : vector<2x96xf32> to vector<2x32xf32>
    %120 = vector.extract_strided_slice %110 {offsets = [0, 32], sizes = [2, 32], strides = [1, 1]} : vector<2x96xf32> to vector<2x32xf32>
    %121 = arith.addf %119, %120 : vector<2x32xf32>
    %122 = arith.negf %121 : vector<2x32xf32>
    %123 = math.exp %122 : vector<2x32xf32>
    %cst_34 = arith.constant 1.000000e+00 : f32
    %124 = vector.broadcast %cst_34 : f32 to vector<2x32xf32>
    %125 = arith.addf %124, %123 : vector<2x32xf32>
    %126 = arith.divf %124, %125 : vector<2x32xf32>
    %127 = vector.extract_strided_slice %108 {offsets = [0, 64], sizes = [2, 32], strides = [1, 1]} : vector<2x96xf32> to vector<2x32xf32>
    %128 = vector.extract_strided_slice %110 {offsets = [0, 64], sizes = [2, 32], strides = [1, 1]} : vector<2x96xf32> to vector<2x32xf32>
    %129 = arith.mulf %118, %128 : vector<2x32xf32>
    %130 = arith.addf %127, %129 : vector<2x32xf32>
    %131 = math.tanh %130 : vector<2x32xf32>
    %cst_35 = arith.constant 1.000000e+00 : f32
    %132 = vector.broadcast %cst_35 : f32 to vector<2x32xf32>
    %133 = arith.subf %132, %126 : vector<2x32xf32>
    %134 = arith.mulf %133, %131 : vector<2x32xf32>
    %135 = arith.mulf %126, %104 : vector<2x32xf32>
    %136 = arith.addf %134, %135 : vector<2x32xf32>
    %c0_36 = arith.constant 0 : index
    %c4 = arith.constant 4 : index
    %c0_37 = arith.constant 0 : index
    %137 = vector.load %arg1[%c0_36, %c4, %c0_37] : memref<2x8x32xf32, #tpu.memory_space<vmem>>, vector<2x1x32xf32>
    %138 = vector.shape_cast %137 : vector<2x1x32xf32> to vector<2x32xf32>
    %cst_38 = arith.constant dense<0.000000e+00> : vector<2x96xf32>
    %139 = tpu.matmul %138, %0, %cst_38 {dimension_numbers = #tpu.dot_dimension_numbers<[1], [0], [0], [1], [0, 0, 1, 1], [], []>} : vector<2x32xf32>, vector<32x96xf32>, vector<2x96xf32> -> vector<2x96xf32>
    %140 = arith.addf %139, %4 : vector<2x96xf32>
    %cst_39 = arith.constant dense<0.000000e+00> : vector<2x96xf32>
    %141 = tpu.matmul %136, %1, %cst_39 {dimension_numbers = #tpu.dot_dimension_numbers<[1], [0], [0], [1], [0, 0, 1, 1], [], []>} : vector<2x32xf32>, vector<32x96xf32>, vector<2x96xf32> -> vector<2x96xf32>
    %142 = arith.addf %141, %7 : vector<2x96xf32>
    %143 = vector.extract_strided_slice %140 {offsets = [0, 0], sizes = [2, 32], strides = [1, 1]} : vector<2x96xf32> to vector<2x32xf32>
    %144 = vector.extract_strided_slice %142 {offsets = [0, 0], sizes = [2, 32], strides = [1, 1]} : vector<2x96xf32> to vector<2x32xf32>
    %145 = arith.addf %143, %144 : vector<2x32xf32>
    %146 = arith.negf %145 : vector<2x32xf32>
    %147 = math.exp %146 : vector<2x32xf32>
    %cst_40 = arith.constant 1.000000e+00 : f32
    %148 = vector.broadcast %cst_40 : f32 to vector<2x32xf32>
    %149 = arith.addf %148, %147 : vector<2x32xf32>
    %150 = arith.divf %148, %149 : vector<2x32xf32>
    %151 = vector.extract_strided_slice %140 {offsets = [0, 32], sizes = [2, 32], strides = [1, 1]} : vector<2x96xf32> to vector<2x32xf32>
    %152 = vector.extract_strided_slice %142 {offsets = [0, 32], sizes = [2, 32], strides = [1, 1]} : vector<2x96xf32> to vector<2x32xf32>
    %153 = arith.addf %151, %152 : vector<2x32xf32>
    %154 = arith.negf %153 : vector<2x32xf32>
    %155 = math.exp %154 : vector<2x32xf32>
    %cst_41 = arith.constant 1.000000e+00 : f32
    %156 = vector.broadcast %cst_41 : f32 to vector<2x32xf32>
    %157 = arith.addf %156, %155 : vector<2x32xf32>
    %158 = arith.divf %156, %157 : vector<2x32xf32>
    %159 = vector.extract_strided_slice %140 {offsets = [0, 64], sizes = [2, 32], strides = [1, 1]} : vector<2x96xf32> to vector<2x32xf32>
    %160 = vector.extract_strided_slice %142 {offsets = [0, 64], sizes = [2, 32], strides = [1, 1]} : vector<2x96xf32> to vector<2x32xf32>
    %161 = arith.mulf %150, %160 : vector<2x32xf32>
    %162 = arith.addf %159, %161 : vector<2x32xf32>
    %163 = math.tanh %162 : vector<2x32xf32>
    %cst_42 = arith.constant 1.000000e+00 : f32
    %164 = vector.broadcast %cst_42 : f32 to vector<2x32xf32>
    %165 = arith.subf %164, %158 : vector<2x32xf32>
    %166 = arith.mulf %165, %163 : vector<2x32xf32>
    %167 = arith.mulf %158, %136 : vector<2x32xf32>
    %168 = arith.addf %166, %167 : vector<2x32xf32>
    %c0_43 = arith.constant 0 : index
    %c5 = arith.constant 5 : index
    %c0_44 = arith.constant 0 : index
    %169 = vector.load %arg1[%c0_43, %c5, %c0_44] : memref<2x8x32xf32, #tpu.memory_space<vmem>>, vector<2x1x32xf32>
    %170 = vector.shape_cast %169 : vector<2x1x32xf32> to vector<2x32xf32>
    %cst_45 = arith.constant dense<0.000000e+00> : vector<2x96xf32>
    %171 = tpu.matmul %170, %0, %cst_45 {dimension_numbers = #tpu.dot_dimension_numbers<[1], [0], [0], [1], [0, 0, 1, 1], [], []>} : vector<2x32xf32>, vector<32x96xf32>, vector<2x96xf32> -> vector<2x96xf32>
    %172 = arith.addf %171, %4 : vector<2x96xf32>
    %cst_46 = arith.constant dense<0.000000e+00> : vector<2x96xf32>
    %173 = tpu.matmul %168, %1, %cst_46 {dimension_numbers = #tpu.dot_dimension_numbers<[1], [0], [0], [1], [0, 0, 1, 1], [], []>} : vector<2x32xf32>, vector<32x96xf32>, vector<2x96xf32> -> vector<2x96xf32>
    %174 = arith.addf %173, %7 : vector<2x96xf32>
    %175 = vector.extract_strided_slice %172 {offsets = [0, 0], sizes = [2, 32], strides = [1, 1]} : vector<2x96xf32> to vector<2x32xf32>
    %176 = vector.extract_strided_slice %174 {offsets = [0, 0], sizes = [2, 32], strides = [1, 1]} : vector<2x96xf32> to vector<2x32xf32>
    %177 = arith.addf %175, %176 : vector<2x32xf32>
    %178 = arith.negf %177 : vector<2x32xf32>
    %179 = math.exp %178 : vector<2x32xf32>
    %cst_47 = arith.constant 1.000000e+00 : f32
    %180 = vector.broadcast %cst_47 : f32 to vector<2x32xf32>
    %181 = arith.addf %180, %179 : vector<2x32xf32>
    %182 = arith.divf %180, %181 : vector<2x32xf32>
    %183 = vector.extract_strided_slice %172 {offsets = [0, 32], sizes = [2, 32], strides = [1, 1]} : vector<2x96xf32> to vector<2x32xf32>
    %184 = vector.extract_strided_slice %174 {offsets = [0, 32], sizes = [2, 32], strides = [1, 1]} : vector<2x96xf32> to vector<2x32xf32>
    %185 = arith.addf %183, %184 : vector<2x32xf32>
    %186 = arith.negf %185 : vector<2x32xf32>
    %187 = math.exp %186 : vector<2x32xf32>
    %cst_48 = arith.constant 1.000000e+00 : f32
    %188 = vector.broadcast %cst_48 : f32 to vector<2x32xf32>
    %189 = arith.addf %188, %187 : vector<2x32xf32>
    %190 = arith.divf %188, %189 : vector<2x32xf32>
    %191 = vector.extract_strided_slice %172 {offsets = [0, 64], sizes = [2, 32], strides = [1, 1]} : vector<2x96xf32> to vector<2x32xf32>
    %192 = vector.extract_strided_slice %174 {offsets = [0, 64], sizes = [2, 32], strides = [1, 1]} : vector<2x96xf32> to vector<2x32xf32>
    %193 = arith.mulf %182, %192 : vector<2x32xf32>
    %194 = arith.addf %191, %193 : vector<2x32xf32>
    %195 = math.tanh %194 : vector<2x32xf32>
    %cst_49 = arith.constant 1.000000e+00 : f32
    %196 = vector.broadcast %cst_49 : f32 to vector<2x32xf32>
    %197 = arith.subf %196, %190 : vector<2x32xf32>
    %198 = arith.mulf %197, %195 : vector<2x32xf32>
    %199 = arith.mulf %190, %168 : vector<2x32xf32>
    %200 = arith.addf %198, %199 : vector<2x32xf32>
    %c0_50 = arith.constant 0 : index
    %c6 = arith.constant 6 : index
    %c0_51 = arith.constant 0 : index
    %201 = vector.load %arg1[%c0_50, %c6, %c0_51] : memref<2x8x32xf32, #tpu.memory_space<vmem>>, vector<2x1x32xf32>
    %202 = vector.shape_cast %201 : vector<2x1x32xf32> to vector<2x32xf32>
    %cst_52 = arith.constant dense<0.000000e+00> : vector<2x96xf32>
    %203 = tpu.matmul %202, %0, %cst_52 {dimension_numbers = #tpu.dot_dimension_numbers<[1], [0], [0], [1], [0, 0, 1, 1], [], []>} : vector<2x32xf32>, vector<32x96xf32>, vector<2x96xf32> -> vector<2x96xf32>
    %204 = arith.addf %203, %4 : vector<2x96xf32>
    %cst_53 = arith.constant dense<0.000000e+00> : vector<2x96xf32>
    %205 = tpu.matmul %200, %1, %cst_53 {dimension_numbers = #tpu.dot_dimension_numbers<[1], [0], [0], [1], [0, 0, 1, 1], [], []>} : vector<2x32xf32>, vector<32x96xf32>, vector<2x96xf32> -> vector<2x96xf32>
    %206 = arith.addf %205, %7 : vector<2x96xf32>
    %207 = vector.extract_strided_slice %204 {offsets = [0, 0], sizes = [2, 32], strides = [1, 1]} : vector<2x96xf32> to vector<2x32xf32>
    %208 = vector.extract_strided_slice %206 {offsets = [0, 0], sizes = [2, 32], strides = [1, 1]} : vector<2x96xf32> to vector<2x32xf32>
    %209 = arith.addf %207, %208 : vector<2x32xf32>
    %210 = arith.negf %209 : vector<2x32xf32>
    %211 = math.exp %210 : vector<2x32xf32>
    %cst_54 = arith.constant 1.000000e+00 : f32
    %212 = vector.broadcast %cst_54 : f32 to vector<2x32xf32>
    %213 = arith.addf %212, %211 : vector<2x32xf32>
    %214 = arith.divf %212, %213 : vector<2x32xf32>
    %215 = vector.extract_strided_slice %204 {offsets = [0, 32], sizes = [2, 32], strides = [1, 1]} : vector<2x96xf32> to vector<2x32xf32>
    %216 = vector.extract_strided_slice %206 {offsets = [0, 32], sizes = [2, 32], strides = [1, 1]} : vector<2x96xf32> to vector<2x32xf32>
    %217 = arith.addf %215, %216 : vector<2x32xf32>
    %218 = arith.negf %217 : vector<2x32xf32>
    %219 = math.exp %218 : vector<2x32xf32>
    %cst_55 = arith.constant 1.000000e+00 : f32
    %220 = vector.broadcast %cst_55 : f32 to vector<2x32xf32>
    %221 = arith.addf %220, %219 : vector<2x32xf32>
    %222 = arith.divf %220, %221 : vector<2x32xf32>
    %223 = vector.extract_strided_slice %204 {offsets = [0, 64], sizes = [2, 32], strides = [1, 1]} : vector<2x96xf32> to vector<2x32xf32>
    %224 = vector.extract_strided_slice %206 {offsets = [0, 64], sizes = [2, 32], strides = [1, 1]} : vector<2x96xf32> to vector<2x32xf32>
    %225 = arith.mulf %214, %224 : vector<2x32xf32>
    %226 = arith.addf %223, %225 : vector<2x32xf32>
    %227 = math.tanh %226 : vector<2x32xf32>
    %cst_56 = arith.constant 1.000000e+00 : f32
    %228 = vector.broadcast %cst_56 : f32 to vector<2x32xf32>
    %229 = arith.subf %228, %222 : vector<2x32xf32>
    %230 = arith.mulf %229, %227 : vector<2x32xf32>
    %231 = arith.mulf %222, %200 : vector<2x32xf32>
    %232 = arith.addf %230, %231 : vector<2x32xf32>
    %c0_57 = arith.constant 0 : index
    %c7 = arith.constant 7 : index
    %c0_58 = arith.constant 0 : index
    %233 = vector.load %arg1[%c0_57, %c7, %c0_58] : memref<2x8x32xf32, #tpu.memory_space<vmem>>, vector<2x1x32xf32>
    %234 = vector.shape_cast %233 : vector<2x1x32xf32> to vector<2x32xf32>
    %cst_59 = arith.constant dense<0.000000e+00> : vector<2x96xf32>
    %235 = tpu.matmul %234, %0, %cst_59 {dimension_numbers = #tpu.dot_dimension_numbers<[1], [0], [0], [1], [0, 0, 1, 1], [], []>} : vector<2x32xf32>, vector<32x96xf32>, vector<2x96xf32> -> vector<2x96xf32>
    %236 = arith.addf %235, %4 : vector<2x96xf32>
    %cst_60 = arith.constant dense<0.000000e+00> : vector<2x96xf32>
    %237 = tpu.matmul %232, %1, %cst_60 {dimension_numbers = #tpu.dot_dimension_numbers<[1], [0], [0], [1], [0, 0, 1, 1], [], []>} : vector<2x32xf32>, vector<32x96xf32>, vector<2x96xf32> -> vector<2x96xf32>
    %238 = arith.addf %237, %7 : vector<2x96xf32>
    %239 = vector.extract_strided_slice %236 {offsets = [0, 0], sizes = [2, 32], strides = [1, 1]} : vector<2x96xf32> to vector<2x32xf32>
    %240 = vector.extract_strided_slice %238 {offsets = [0, 0], sizes = [2, 32], strides = [1, 1]} : vector<2x96xf32> to vector<2x32xf32>
    %241 = arith.addf %239, %240 : vector<2x32xf32>
    %242 = arith.negf %241 : vector<2x32xf32>
    %243 = math.exp %242 : vector<2x32xf32>
    %cst_61 = arith.constant 1.000000e+00 : f32
    %244 = vector.broadcast %cst_61 : f32 to vector<2x32xf32>
    %245 = arith.addf %244, %243 : vector<2x32xf32>
    %246 = arith.divf %244, %245 : vector<2x32xf32>
    %247 = vector.extract_strided_slice %236 {offsets = [0, 32], sizes = [2, 32], strides = [1, 1]} : vector<2x96xf32> to vector<2x32xf32>
    %248 = vector.extract_strided_slice %238 {offsets = [0, 32], sizes = [2, 32], strides = [1, 1]} : vector<2x96xf32> to vector<2x32xf32>
    %249 = arith.addf %247, %248 : vector<2x32xf32>
    %250 = arith.negf %249 : vector<2x32xf32>
    %251 = math.exp %250 : vector<2x32xf32>
    %cst_62 = arith.constant 1.000000e+00 : f32
    %252 = vector.broadcast %cst_62 : f32 to vector<2x32xf32>
    %253 = arith.addf %252, %251 : vector<2x32xf32>
    %254 = arith.divf %252, %253 : vector<2x32xf32>
    %255 = vector.extract_strided_slice %236 {offsets = [0, 64], sizes = [2, 32], strides = [1, 1]} : vector<2x96xf32> to vector<2x32xf32>
    %256 = vector.extract_strided_slice %238 {offsets = [0, 64], sizes = [2, 32], strides = [1, 1]} : vector<2x96xf32> to vector<2x32xf32>
    %257 = arith.mulf %246, %256 : vector<2x32xf32>
    %258 = arith.addf %255, %257 : vector<2x32xf32>
    %259 = math.tanh %258 : vector<2x32xf32>
    %cst_63 = arith.constant 1.000000e+00 : f32
    %260 = vector.broadcast %cst_63 : f32 to vector<2x32xf32>
    %261 = arith.subf %260, %254 : vector<2x32xf32>
    %262 = arith.mulf %261, %259 : vector<2x32xf32>
    %263 = arith.mulf %254, %232 : vector<2x32xf32>
    %264 = arith.addf %262, %263 : vector<2x32xf32>
    %cst_64 = arith.constant 0.000000e+00 : f32
    %265 = vector.broadcast %cst_64 : f32 to vector<2x32xf32>
    %266 = arith.maximumf %264, %265 : vector<2x32xf32>
    %c0_65 = arith.constant 0 : index
    %c0_66 = arith.constant 0 : index
    %267 = vector.load %arg6[%c0_65, %c0_66] : memref<32x32xf32, #tpu.memory_space<vmem>>, vector<32x32xf32>
    %cst_67 = arith.constant dense<0.000000e+00> : vector<2x32xf32>
    %268 = tpu.matmul %266, %267, %cst_67 {dimension_numbers = #tpu.dot_dimension_numbers<[1], [0], [0], [1], [0, 0, 1, 1], [], []>} : vector<2x32xf32>, vector<32x32xf32>, vector<2x32xf32> -> vector<2x32xf32>
    %c0_68 = arith.constant 0 : index
    %c0_69 = arith.constant 0 : index
    %269 = vector.load %arg7[%c0_68, %c0_69] : memref<1x32xf32, #tpu.memory_space<vmem>>, vector<1x32xf32>
    %270 = vector.broadcast %269 : vector<1x32xf32> to vector<2x32xf32>
    %271 = arith.addf %268, %270 : vector<2x32xf32>
    %272 = math.tanh %271 : vector<2x32xf32>
    %c0_70 = arith.constant 0 : index
    %c0_71 = arith.constant 0 : index
    %273 = vector.load %arg8[%c0_70, %c0_71] : memref<32x16xf32, #tpu.memory_space<vmem>>, vector<32x16xf32>
    %cst_72 = arith.constant dense<0.000000e+00> : vector<2x16xf32>
    %274 = tpu.matmul %272, %273, %cst_72 {dimension_numbers = #tpu.dot_dimension_numbers<[1], [0], [0], [1], [0, 0, 1, 1], [], []>} : vector<2x32xf32>, vector<32x16xf32>, vector<2x16xf32> -> vector<2x16xf32>
    %c0_73 = arith.constant 0 : index
    %c0_74 = arith.constant 0 : index
    %275 = vector.load %arg9[%c0_73, %c0_74] : memref<1x16xf32, #tpu.memory_space<vmem>>, vector<1x16xf32>
    %276 = vector.broadcast %275 : vector<1x16xf32> to vector<2x16xf32>
    %277 = arith.addf %274, %276 : vector<2x16xf32>
    %c0_75 = arith.constant 0 : index
    %c0_76 = arith.constant 0 : index
    %278 = vector.load %arg10[%c0_75, %c0_76] : memref<2x16xf32, #tpu.memory_space<vmem>>, vector<2x16xf32>
    tpu.vector_store %arg10[%c0_75, %c0_76], %277 {strides = array<i32>} : memref<2x16xf32, #tpu.memory_space<vmem>>, vector<2x16xf32>,
    return
  }
  func.func @transform_0(%arg0: i32) -> (i32, i32, i32) {
    %c0_i32 = arith.constant 0 : i32
    %c0_i32_0 = arith.constant 0 : i32
    %c0_i32_1 = arith.constant 0 : i32
    %c0_i32_2 = arith.constant 0 : i32
    return %c0_i32, %c0_i32_0, %c0_i32_1 : i32, i32, i32
  }
  func.func @transform_1(%arg0: i32) -> (i32, i32) {
    %c0_i32 = arith.constant 0 : i32
    %c0_i32_0 = arith.constant 0 : i32
    %c0_i32_1 = arith.constant 0 : i32
    return %c0_i32, %c0_i32_0 : i32, i32
  }
  func.func @transform_2(%arg0: i32) -> (i32, i32) {
    %c0_i32 = arith.constant 0 : i32
    %c0_i32_0 = arith.constant 0 : i32
    %c0_i32_1 = arith.constant 0 : i32
    return %c0_i32, %c0_i32_0 : i32, i32
  }
  func.func @transform_3(%arg0: i32) -> (i32, i32) {
    %c0_i32 = arith.constant 0 : i32
    %c0_i32_0 = arith.constant 0 : i32
    %c0_i32_1 = arith.constant 0 : i32
    return %c0_i32, %c0_i32_0 : i32, i32
  }
  func.func @transform_4(%arg0: i32) -> (i32, i32) {
    %c0_i32 = arith.constant 0 : i32
    %c0_i32_0 = arith.constant 0 : i32
    %c0_i32_1 = arith.constant 0 : i32
    return %c0_i32, %c0_i32_0 : i32, i32
  }
  func.func @transform_5(%arg0: i32) -> (i32, i32) {
    %c0_i32 = arith.constant 0 : i32
    %c0_i32_0 = arith.constant 0 : i32
    %c0_i32_1 = arith.constant 0 : i32
    return %c0_i32, %c0_i32_0 : i32, i32
  }
  func.func @transform_6(%arg0: i32) -> (i32, i32) {
    %c0_i32 = arith.constant 0 : i32
    %c0_i32_0 = arith.constant 0 : i32
    %c0_i32_1 = arith.constant 0 : i32
    return %c0_i32, %c0_i32_0 : i32, i32
  }
  func.func @transform_7(%arg0: i32) -> (i32, i32) {
    %c0_i32 = arith.constant 0 : i32
    %c0_i32_0 = arith.constant 0 : i32
    %c0_i32_1 = arith.constant 0 : i32
    return %c0_i32, %c0_i32_0 : i32, i32
  }
  func.func @transform_8(%arg0: i32) -> (i32, i32) {
    %c0_i32 = arith.constant 0 : i32
    %c0_i32_0 = arith.constant 0 : i32
    %c0_i32_1 = arith.constant 0 : i32
    return %c0_i32, %c0_i32_0 : i32, i32
  }
  func.func @transform_9(%arg0: i32) -> (i32, i32) {
    %c0_i32 = arith.constant 0 : i32
    %c0_i32_0 = arith.constant 0 : i32
    %c0_i32_1 = arith.constant 0 : i32
    return %c0_i32, %c0_i32_0 : i32, i32
  }
}

</mosaic_0001>

<llo_original>
// kernel: tpu_custom_call.1
$region0: #{tpu_custom_call.1}
  #allocation0 [shape = 'u32[]', space=smem, size = 0x4, offset = 0x4, fixed_abs, tag = 'smem constant byte address 0x4 - core index']
  #allocation1 [shape = 'u32[72,128]{1,0:T(1,128)}', space=vmem, size = 0x9000, scoped, tag = 'internal scratch']
  %s0 = inlined_call_operand.vmem [shape: f32[2,8,32], index: 0, kind: input, shape index: {}]
  %s1 = inlined_call_operand.vmem [shape: f32[32,96], index: 1, kind: input, shape index: {}]
  %s2 = inlined_call_operand.hbm [shape: f32[32,96], index: 2, kind: input, shape index: {}]
  %s3 = inlined_call_operand.vmem [shape: f32[1,96], index: 3, kind: input, shape index: {}]
  %s4 = inlined_call_operand.vmem [shape: f32[1,96], index: 4, kind: input, shape index: {}]
  %s5 = inlined_call_operand.hbm [shape: f32[32,32], index: 5, kind: input, shape index: {}]
  %s6 = inlined_call_operand.vmem [shape: f32[1,32], index: 6, kind: input, shape index: {}]
  %s7 = inlined_call_operand.vmem [shape: f32[32,16], index: 7, kind: input, shape index: {}]
  %s8 = inlined_call_operand.vmem [shape: f32[1,16], index: 8, kind: input, shape index: {}]
  %s9 = inlined_call_operand.hbm [shape: f32[2,16], index: 9, kind: output, shape index: {}]
  %s10 = sld [smem:[#allocation0]]
  $region54: #{tpu_custom_call.1} parent=0
    _
  %s12 = ssub.s32 1, %s10
  %s13 = scalar_select 0, %s12, %s10
  $region1: #{tpu_custom_call.1} parent=0
    #allocation2 [shape = 'u8[16384]{0}', space=vmem, size = 0x4000, scoped, tag = 'input window, operand 2, single buffered']
    #allocation3 [shape = 's32[1]{0}', space=sflag, size = 0x4, scoped, tag = 'scoped memory for tpu_custom_call.1']
    #allocation4 [shape = 's32[1]{0}', space=sflag, size = 0x4, scoped, tag = 'scoped memory for tpu_custom_call.1']
    #allocation5 [shape = 'u8[16384]{0}', space=vmem, size = 0x4000, scoped, tag = 'input window, operand 5, single buffered']
    #allocation6 [shape = 's32[1]{0}', space=sflag, size = 0x4, scoped, tag = 'scoped memory for tpu_custom_call.1']
    #allocation7 [shape = 'u8[1024]{0}', space=vmem, size = 0x400, scoped, tag = 'output window, operand 0, single buffered']
    %14 = vsyncpa [#allocation3], 0
    %15 = vsyncpa [#allocation6], 0
    %16 = vsyncpa [#allocation4], 0
    // Predicated region
    $region2: #{tpu_custom_call.1} parent=1 // pred_check
      _
    $region3: #{tpu_custom_call.1} parent=1 // pred_check_branch
      %18 = sbr.rel (0) target = $region5
    $region4: #{tpu_custom_call.1} parent=1 // pred_region
      _
    $region5: #{tpu_custom_call.1} parent=1 // pred_fallthru
      _
    // Predicated region
    $region6: #{tpu_custom_call.1} parent=1 // pred_check
      _
    $region7: #{tpu_custom_call.1} parent=1 // pred_check_branch
      %20 = sbr.rel (0) target = $region9
    $region8: #{tpu_custom_call.1} parent=1 // pred_region
      _
    $region9: #{tpu_custom_call.1} parent=1 // pred_fallthru
      _
    // Predicated region
    $region10: #{tpu_custom_call.1} parent=1 // pred_check
      _
    $region11: #{tpu_custom_call.1} parent=1 // pred_check_branch
      %22 = sbr.rel (0) target = $region13
    $region12: #{tpu_custom_call.1} parent=1 // pred_region
      %24 = vsyncadd [#allocation3], 0
      %s25 = sshll.u32 %s2, 4
      %s26 = int_to_ptr.hbm [resolvable:$true] %s25
      %s27 = sshll.u32 [#allocation2], 4
      %s28 = int_to_ptr.vmem [resolvable:$true] %s27
      %33 = dma.hbm_to_vmem [thread:$0]  %s26, 512, %s28, [#allocation3], 128, 128, 8
    $region13: #{tpu_custom_call.1} parent=1 // pred_fallthru
      _
    // Predicated region
    $region14: #{tpu_custom_call.1} parent=1 // pred_check
      _
    $region15: #{tpu_custom_call.1} parent=1 // pred_check_branch
      %35 = sbr.rel (0) target = $region17
    $region16: #{tpu_custom_call.1} parent=1 // pred_region
      _
    $region17: #{tpu_custom_call.1} parent=1 // pred_fallthru
      _
    // Predicated region
    $region18: #{tpu_custom_call.1} parent=1 // pred_check
      _
    $region19: #{tpu_custom_call.1} parent=1 // pred_check_branch
      %37 = sbr.rel (0) target = $region21
    $region20: #{tpu_custom_call.1} parent=1 // pred_region
      _
    $region21: #{tpu_custom_call.1} parent=1 // pred_fallthru
      _
    // Predicated region
    $region22: #{tpu_custom_call.1} parent=1 // pred_check
      _
    $region23: #{tpu_custom_call.1} parent=1 // pred_check_branch
      %39 = sbr.rel (0) target = $region25
    $region24: #{tpu_custom_call.1} parent=1 // pred_region
      %41 = vsyncadd [#allocation6], 0
      %s42 = sshll.u32 %s5, 4
      %s43 = int_to_ptr.hbm [resolvable:$true] %s42
      %s44 = sshll.u32 [#allocation5], 4
      %s45 = int_to_ptr.vmem [resolvable:$true] %s44
      %50 = dma.hbm_to_vmem [thread:$0]  %s43, 512, %s45, [#allocation6], 128, 128, 8
    $region25: #{tpu_custom_call.1} parent=1 // pred_fallthru
      _
    // Predicated region
    $region26: #{tpu_custom_call.1} parent=1 // pred_check
      _
    $region27: #{tpu_custom_call.1} parent=1 // pred_check_branch
      %52 = sbr.rel (0) target = $region29
    $region28: #{tpu_custom_call.1} parent=1 // pred_region
      _
    $region29: #{tpu_custom_call.1} parent=1 // pred_fallthru
      _
    // Predicated region
    $region30: #{tpu_custom_call.1} parent=1 // pred_check
      _
    $region31: #{tpu_custom_call.1} parent=1 // pred_check_branch
      %54 = sbr.rel (0) target = $region33
    $region32: #{tpu_custom_call.1} parent=1 // pred_region
      _
    $region33: #{tpu_custom_call.1} parent=1 // pred_fallthru
      _
    // Predicated region
    $region34: #{tpu_custom_call.1} parent=1 // pred_check
      _
    $region35: #{tpu_custom_call.1} parent=1 // pred_check_branch
      %56 = sbr.rel (0) target = $region37
    $region36: #{tpu_custom_call.1} parent=1 // pred_region
      _
    $region37: #{tpu_custom_call.1} parent=1 // pred_fallthru
      _
    // Predicated region
    $region38: #{tpu_custom_call.1} parent=1 // pred_check
      _
    $region39: #{tpu_custom_call.1} parent=1 // pred_check_branch
      %58 = sbr.rel (0) target = $region41
    $region40: #{tpu_custom_call.1} parent=1 // pred_region
      %60 = dma.done [#allocation3], 512
    $region41: #{tpu_custom_call.1} parent=1 // pred_fallthru
      _
    // Predicated region
    $region42: #{tpu_custom_call.1} parent=1 // pred_check
      _
    $region43: #{tpu_custom_call.1} parent=1 // pred_check_branch
      %62 = sbr.rel (0) target = $region45
    $region44: #{tpu_custom_call.1} parent=1 // pred_region
      %64 = dma.done [#allocation6], 512
    $region45: #{tpu_custom_call.1} parent=1 // pred_fallthru
      _
    %v65 = vld [vmem:[%s1] sm:$0xff]
    %v66 = vld [vmem:[%s1 + $0x8] sm:$0xff]
    %v67 = vld [vmem:[%s1 + $0x10] sm:$0xff]
    %v68 = vld [vmem:[%s1 + $0x18] sm:$0xff]
    %v69 = vld [vmem:[#allocation2] sm:$0xff]
    %v70 = vld [vmem:[#allocation2 + $0x8] sm:$0xff]
    %v71 = vld [vmem:[#allocation2 + $0x10] sm:$0xff]
    %v72 = vld [vmem:[#allocation2 + $0x18] sm:$0xff]
    %v73 = vld [vmem:[%s3] sm:$0x1]
    %v75 = vperm.slane %v73, 0
    %v77 = vld [vmem:[%s4] sm:$0x1]
    %v79 = vperm.slane %v77, 0
    %v81 = vld [vmem:[%s0] sm:$0x1]
    %v82 = vld [vmem:[%s0 + $0x8] sm:$0x1]
    %v85 = vrot.slane %v82, 7
    %vm86 = vcmask 1041409
    %v87 = vsel %vm86, %v85, %v81
    %vm88 = vcmask 261120
    %v89 = vsel %vm88, %v87, 0
    %91 = vmatpush.msra.mxu0 0.0
    %92 = vmatpush.msra.mxu0 0.0
    %93 = vmatpush.msra.mxu0 0.0
    %94 = vmatpush.msra.mxu0 0.0
    %95 = vmatpush.msra.mxu0 0.0
    %96 = vmatpush.msra.mxu0 0.0
    %97 = vmatpush.msra.mxu0 0.0
    %98 = vmatpush.msra.mxu0 0.0
    %99 = vmatpush.msra.mxu0 0.0
    %100 = vmatpush.msra.mxu0 0.0
    %101 = vmatpush.msra.mxu0 0.0
    %102 = vmatpush.msra.mxu0 0.0
    %103 = vmatpush.msra.mxu0 %v68
    %104 = vmatpush.msra.mxu0 %v67
    %105 = vmatpush.msra.mxu0 %v66
    %106 = vmatpush.msra.mxu0 %v65
    %107 = vmatmul.f32.gmra.mxu0 %v89
    %v108 = vpop.f32.mrf.mxu0
    %v109 = vadd.f32 %v75, %v108
    %110 = vdwg.mxu0
    %v112 = vsel %vm88, 0.0, 0
    %114 = vmatpush.msra.mxu0 0.0
    %115 = vmatpush.msra.mxu0 0.0
    %116 = vmatpush.msra.mxu0 0.0
    %117 = vmatpush.msra.mxu0 0.0
    %118 = vmatpush.msra.mxu0 0.0
    %119 = vmatpush.msra.mxu0 0.0
    %120 = vmatpush.msra.mxu0 0.0
    %121 = vmatpush.msra.mxu0 0.0
    %122 = vmatpush.msra.mxu0 0.0
    %123 = vmatpush.msra.mxu0 0.0
    %124 = vmatpush.msra.mxu0 0.0
    %125 = vmatpush.msra.mxu0 0.0
    %126 = vmatpush.msra.mxu0 %v72
    %127 = vmatpush.msra.mxu0 %v71
    %128 = vmatpush.msra.mxu0 %v70
    %129 = vmatpush.msra.mxu0 %v69
    %130 = vmatmul.f32.gmra.mxu0 %v112
    %v131 = vpop.f32.mrf.mxu0
    %v132 = vadd.f32 %v79, %v131
    %133 = vdwg.mxu0
    %v134 = vadd.f32 %v109, %v132
    %v135 = vxor.u32 %v134, 2147483648
    %v136 = vmul.f32 %v135, 1.442695
    %v137 = vpow.pop %v136
    %v138 = vadd.f32 %v137, 1.0
    %v139 = vrcp.pop %v138
    %v140 = vmul.f32 %v138, %v139
    %v141 = vsub.f32 1.0, %v140
    %v142 = vmul.f32 %v139, %v141
    %v143 = vadd.f32 %v139, %v142
    %vm144 = vweird.f32 %v138
    %vm145 = vweird.f32 %v139
    %vm146 = vmor %vm144, %vm145
    %v147 = vsel %vm146, %v139, %v143
    %v148 = vand.u32 2147483647, %v138
    %vm149 = vcmp.eq.f32.partialorder %v148, 8.507059e+37
    %v150 = vand.u32 %v138, 2147483648
    %v151 = vor.u32 1.1754944e-38, %v150
    %v152 = vsel %vm149, %v151, %v147
    %v153 = vmul.f32 1.0, %v152
    %155 = vrot.lane.b32.xlu0 %v132, 64
    %v156 = vpop.permute.xlu0 %155
    %v158 = vmul.f32 %v153, %v156
    %160 = vrot.lane.b32.xlu0 %v158, 64
    %v161 = vpop.permute.xlu0 %160
    %v163 = vadd.f32 %v109, %v161
    %v164 = vtanh.pop %v163
    %v165 = vsub.f32 1.0, %v153
    %167 = vrot.lane.b32.xlu0 %v164, 96
    %v168 = vpop.permute.xlu0 %167
    %v170 = vmul.f32 %v165, %v168
    %v171 = vmul.f32 %v153, 0.0
    %v172 = vadd.f32 %v170, %v171
    %v173 = vld [vmem:[%s0 + $0x1] sm:$0x1]
    %v174 = vld [vmem:[%s0 + $0x9] sm:$0x1]
    %v177 = vrot.slane %v174, 7
    %v178 = vsel %vm86, %v177, %v173
    %v179 = vsel %vm88, %v178, 0
    %181 = vmatpush.msra.mxu0 0.0
    %182 = vmatpush.msra.mxu0 0.0
    %183 = vmatpush.msra.mxu0 0.0
    %184 = vmatpush.msra.mxu0 0.0
    %185 = vmatpush.msra.mxu0 0.0
    %186 = vmatpush.msra.mxu0 0.0
    %187 = vmatpush.msra.mxu0 0.0
    %188 = vmatpush.msra.mxu0 0.0
    %189 = vmatpush.msra.mxu0 0.0
    %190 = vmatpush.msra.mxu0 0.0
    %191 = vmatpush.msra.mxu0 0.0
    %192 = vmatpush.msra.mxu0 0.0
    %193 = vmatpush.msra.mxu0 %v68
    %194 = vmatpush.msra.mxu0 %v67
    %195 = vmatpush.msra.mxu0 %v66
    %196 = vmatpush.msra.mxu0 %v65
    %197 = vmatmul.f32.gmra.mxu0 %v179
    %v198 = vpop.f32.mrf.mxu0
    %v199 = vadd.f32 %v75, %v198
    %200 = vdwg.mxu0
    %202 = vrot.lane.b32.xlu0 %v172, 96
    %v203 = vpop.permute.xlu0 %202
    %v204 = vsel %vm88, %v203, 0
    %206 = vmatpush.msra.mxu0 0.0
    %207 = vmatpush.msra.mxu0 0.0
    %208 = vmatpush.msra.mxu0 0.0
    %209 = vmatpush.msra.mxu0 0.0
    %210 = vmatpush.msra.mxu0 0.0
    %211 = vmatpush.msra.mxu0 0.0
    %212 = vmatpush.msra.mxu0 0.0
    %213 = vmatpush.msra.mxu0 0.0
    %214 = vmatpush.msra.mxu0 0.0
    %215 = vmatpush.msra.mxu0 0.0
    %216 = vmatpush.msra.mxu0 0.0
    %217 = vmatpush.msra.mxu0 0.0
    %218 = vmatpush.msra.mxu0 %v72
    %219 = vmatpush.msra.mxu0 %v71
    %220 = vmatpush.msra.mxu0 %v70
    %221 = vmatpush.msra.mxu0 %v69
    %222 = vmatmul.f32.gmra.mxu0 %v204
    %v223 = vpop.f32.mrf.mxu0
    %v224 = vadd.f32 %v79, %v223
    %225 = vdwg.mxu0
    %v226 = vadd.f32 %v199, %v224
    %v227 = vxor.u32 %v226, 2147483648
    %v228 = vmul.f32 %v227, 1.442695
    %v229 = vpow.pop %v228
    %v230 = vadd.f32 %v229, 1.0
    %v231 = vrcp.pop %v230
    %v232 = vmul.f32 %v230, %v231
    %v233 = vsub.f32 1.0, %v232
    %v234 = vmul.f32 %v231, %v233
    %v235 = vadd.f32 %v231, %v234
    %vm236 = vweird.f32 %v230
    %vm237 = vweird.f32 %v231
    %vm238 = vmor %vm236, %vm237
    %v239 = vsel %vm238, %v231, %v235
    %v240 = vand.u32 2147483647, %v230
    %vm241 = vcmp.eq.f32.partialorder %v240, 8.507059e+37
    %v242 = vand.u32 %v230, 2147483648
    %v243 = vor.u32 1.1754944e-38, %v242
    %v244 = vsel %vm241, %v243, %v239
    %v245 = vmul.f32 1.0, %v244
    %247 = vrot.lane.b32.xlu0 %v224, 64
    %v248 = vpop.permute.xlu0 %247
    %v250 = vmul.f32 %v245, %v248
    %252 = vrot.lane.b32.xlu0 %v250, 64
    %v253 = vpop.permute.xlu0 %252
    %v255 = vadd.f32 %v199, %v253
    %v256 = vtanh.pop %v255
    %v257 = vsub.f32 1.0, %v245
    %259 = vrot.lane.b32.xlu0 %v256, 96
    %v260 = vpop.permute.xlu0 %259
    %v262 = vmul.f32 %v257, %v260
    %v263 = vmul.f32 %v245, %v172
    %v264 = vadd.f32 %v262, %v263
    %v265 = vld [vmem:[%s0 + $0x2] sm:$0x1]
    %v266 = vld [vmem:[%s0 + $0xa] sm:$0x1]
    %v269 = vrot.slane %v266, 7
    %v270 = vsel %vm86, %v269, %v265
    %v271 = vsel %vm88, %v270, 0
    %273 = vmatpush.msra.mxu0 0.0
    %274 = vmatpush.msra.mxu0 0.0
    %275 = vmatpush.msra.mxu0 0.0
    %276 = vmatpush.msra.mxu0 0.0
    %277 = vmatpush.msra.mxu0 0.0
    %278 = vmatpush.msra.mxu0 0.0
    %279 = vmatpush.msra.mxu0 0.0
    %280 = vmatpush.msra.mxu0 0.0
    %281 = vmatpush.msra.mxu0 0.0
    %282 = vmatpush.msra.mxu0 0.0
    %283 = vmatpush.msra.mxu0 0.0
    %284 = vmatpush.msra.mxu0 0.0
    %285 = vmatpush.msra.mxu0 %v68
    %286 = vmatpush.msra.mxu0 %v67
    %287 = vmatpush.msra.mxu0 %v66
    %288 = vmatpush.msra.mxu0 %v65
    %289 = vmatmul.f32.gmra.mxu0 %v271
    %v290 = vpop.f32.mrf.mxu0
    %v291 = vadd.f32 %v75, %v290
    %292 = vdwg.mxu0
    %294 = vrot.lane.b32.xlu0 %v264, 96
    %v295 = vpop.permute.xlu0 %294
    %v296 = vsel %vm88, %v295, 0
    %298 = vmatpush.msra.mxu0 0.0
    %299 = vmatpush.msra.mxu0 0.0
    %300 = vmatpush.msra.mxu0 0.0
    %301 = vmatpush.msra.mxu0 0.0
    %302 = vmatpush.msra.mxu0 0.0
    %303 = vmatpush.msra.mxu0 0.0
    %304 = vmatpush.msra.mxu0 0.0
    %305 = vmatpush.msra.mxu0 0.0
    %306 = vmatpush.msra.mxu0 0.0
    %307 = vmatpush.msra.mxu0 0.0
    %308 = vmatpush.msra.mxu0 0.0
    %309 = vmatpush.msra.mxu0 0.0
    %310 = vmatpush.msra.mxu0 %v72
    %311 = vmatpush.msra.mxu0 %v71
    %312 = vmatpush.msra.mxu0 %v70
    %313 = vmatpush.msra.mxu0 %v69
    %314 = vmatmul.f32.gmra.mxu0 %v296
    %v315 = vpop.f32.mrf.mxu0
    %v316 = vadd.f32 %v79, %v315
    %317 = vdwg.mxu0
    %v318 = vadd.f32 %v291, %v316
    %v319 = vxor.u32 %v318, 2147483648
    %v320 = vmul.f32 %v319, 1.442695
    %v321 = vpow.pop %v320
    %v322 = vadd.f32 %v321, 1.0
    %v323 = vrcp.pop %v322
    %v324 = vmul.f32 %v322, %v323
    %v325 = vsub.f32 1.0, %v324
    %v326 = vmul.f32 %v323, %v325
    %v327 = vadd.f32 %v323, %v326
    %vm328 = vweird.f32 %v322
    %vm329 = vweird.f32 %v323
    %vm330 = vmor %vm328, %vm329
    %v331 = vsel %vm330, %v323, %v327
    %v332 = vand.u32 2147483647, %v322
    %vm333 = vcmp.eq.f32.partialorder %v332, 8.507059e+37
    %v334 = vand.u32 %v322, 2147483648
    %v335 = vor.u32 1.1754944e-38, %v334
    %v336 = vsel %vm333, %v335, %v331
    %v337 = vmul.f32 1.0, %v336
    %339 = vrot.lane.b32.xlu0 %v316, 64
    %v340 = vpop.permute.xlu0 %339
    %v342 = vmul.f32 %v337, %v340
    %344 = vrot.lane.b32.xlu0 %v342, 64
    %v345 = vpop.permute.xlu0 %344
    %v347 = vadd.f32 %v291, %v345
    %v348 = vtanh.pop %v347
    %v349 = vsub.f32 1.0, %v337
    %351 = vrot.lane.b32.xlu0 %v348, 96
    %v352 = vpop.permute.xlu0 %351
    %v354 = vmul.f32 %v349, %v352
    %v355 = vmul.f32 %v337, %v264
    %v356 = vadd.f32 %v354, %v355
    %v357 = vld [vmem:[%s0 + $0x3] sm:$0x1]
    %v358 = vld [vmem:[%s0 + $0xb] sm:$0x1]
    %v361 = vrot.slane %v358, 7
    %v362 = vsel %vm86, %v361, %v357
    %v363 = vsel %vm88, %v362, 0
    %365 = vmatpush.msra.mxu0 0.0
    %366 = vmatpush.msra.mxu0 0.0
    %367 = vmatpush.msra.mxu0 0.0
    %368 = vmatpush.msra.mxu0 0.0
    %369 = vmatpush.msra.mxu0 0.0
    %370 = vmatpush.msra.mxu0 0.0
    %371 = vmatpush.msra.mxu0 0.0
    %372 = vmatpush.msra.mxu0 0.0
    %373 = vmatpush.msra.mxu0 0.0
    %374 = vmatpush.msra.mxu0 0.0
    %375 = vmatpush.msra.mxu0 0.0
    %376 = vmatpush.msra.mxu0 0.0
    %377 = vmatpush.msra.mxu0 %v68
    %378 = vmatpush.msra.mxu0 %v67
    %379 = vmatpush.msra.mxu0 %v66
    %380 = vmatpush.msra.mxu0 %v65
    %381 = vmatmul.f32.gmra.mxu0 %v363
    %v382 = vpop.f32.mrf.mxu0
    %v383 = vadd.f32 %v75, %v382
    %384 = vdwg.mxu0
    %386 = vrot.lane.b32.xlu0 %v356, 96
    %v387 = vpop.permute.xlu0 %386
    %v388 = vsel %vm88, %v387, 0
    %390 = vmatpush.msra.mxu0 0.0
    %391 = vmatpush.msra.mxu0 0.0
    %392 = vmatpush.msra.mxu0 0.0
    %393 = vmatpush.msra.mxu0 0.0
    %394 = vmatpush.msra.mxu0 0.0
    %395 = vmatpush.msra.mxu0 0.0
    %396 = vmatpush.msra.mxu0 0.0
    %397 = vmatpush.msra.mxu0 0.0
    %398 = vmatpush.msra.mxu0 0.0
    %399 = vmatpush.msra.mxu0 0.0
    %400 = vmatpush.msra.mxu0 0.0
    %401 = vmatpush.msra.mxu0 0.0
    %402 = vmatpush.msra.mxu0 %v72
    %403 = vmatpush.msra.mxu0 %v71
    %404 = vmatpush.msra.mxu0 %v70
    %405 = vmatpush.msra.mxu0 %v69
    %406 = vmatmul.f32.gmra.mxu0 %v388
    %v407 = vpop.f32.mrf.mxu0
    %v408 = vadd.f32 %v79, %v407
    %409 = vdwg.mxu0
    %v410 = vadd.f32 %v383, %v408
    %v411 = vxor.u32 %v410, 2147483648
    %v412 = vmul.f32 %v411, 1.442695
    %v413 = vpow.pop %v412
    %v414 = vadd.f32 %v413, 1.0
    %v415 = vrcp.pop %v414
    %v416 = vmul.f32 %v414, %v415
    %v417 = vsub.f32 1.0, %v416
    %v418 = vmul.f32 %v415, %v417
    %v419 = vadd.f32 %v415, %v418
    %vm420 = vweird.f32 %v414
    %vm421 = vweird.f32 %v415
    %vm422 = vmor %vm420, %vm421
    %v423 = vsel %vm422, %v415, %v419
    %v424 = vand.u32 2147483647, %v414
    %vm425 = vcmp.eq.f32.partialorder %v424, 8.507059e+37
    %v426 = vand.u32 %v414, 2147483648
    %v427 = vor.u32 1.1754944e-38, %v426
    %v428 = vsel %vm425, %v427, %v423
    %v429 = vmul.f32 1.0, %v428
    %431 = vrot.lane.b32.xlu0 %v408, 64
    %v432 = vpop.permute.xlu0 %431
    %v434 = vmul.f32 %v429, %v432
    %436 = vrot.lane.b32.xlu0 %v434, 64
    %v437 = vpop.permute.xlu0 %436
    %v439 = vadd.f32 %v383, %v437
    %v440 = vtanh.pop %v439
    %v441 = vsub.f32 1.0, %v429
    %443 = vrot.lane.b32.xlu0 %v440, 96
    %v444 = vpop.permute.xlu0 %443
    %v446 = vmul.f32 %v441, %v444
    %v447 = vmul.f32 %v429, %v356
    %v448 = vadd.f32 %v446, %v447
    %v449 = vld [vmem:[%s0 + $0x4] sm:$0x1]
    %v450 = vld [vmem:[%s0 + $0xc] sm:$0x1]
    %v453 = vrot.slane %v450, 7
    %v454 = vsel %vm86, %v453, %v449
    %v455 = vsel %vm88, %v454, 0
    %457 = vmatpush.msra.mxu0 0.0
    %458 = vmatpush.msra.mxu0 0.0
    %459 = vmatpush.msra.mxu0 0.0
    %460 = vmatpush.msra.mxu0 0.0
    %461 = vmatpush.msra.mxu0 0.0
    %462 = vmatpush.msra.mxu0 0.0
    %463 = vmatpush.msra.mxu0 0.0
    %464 = vmatpush.msra.mxu0 0.0
    %465 = vmatpush.msra.mxu0 0.0
    %466 = vmatpush.msra.mxu0 0.0
    %467 = vmatpush.msra.mxu0 0.0
    %468 = vmatpush.msra.mxu0 0.0
    %469 = vmatpush.msra.mxu0 %v68
    %470 = vmatpush.msra.mxu0 %v67
    %471 = vmatpush.msra.mxu0 %v66
    %472 = vmatpush.msra.mxu0 %v65
    %473 = vmatmul.f32.gmra.mxu0 %v455
    %v474 = vpop.f32.mrf.mxu0
    %v475 = vadd.f32 %v75, %v474
    %476 = vdwg.mxu0
    %478 = vrot.lane.b32.xlu0 %v448, 96
    %v479 = vpop.permute.xlu0 %478
    %v480 = vsel %vm88, %v479, 0
    %482 = vmatpush.msra.mxu0 0.0
    %483 = vmatpush.msra.mxu0 0.0
    %484 = vmatpush.msra.mxu0 0.0
    %485 = vmatpush.msra.mxu0 0.0
    %486 = vmatpush.msra.mxu0 0.0
    %487 = vmatpush.msra.mxu0 0.0
    %488 = vmatpush.msra.mxu0 0.0
    %489 = vmatpush.msra.mxu0 0.0
    %490 = vmatpush.msra.mxu0 0.0
    %491 = vmatpush.msra.mxu0 0.0
    %492 = vmatpush.msra.mxu0 0.0
    %493 = vmatpush.msra.mxu0 0.0
    %494 = vmatpush.msra.mxu0 %v72
    %495 = vmatpush.msra.mxu0 %v71
    %496 = vmatpush.msra.mxu0 %v70
    %497 = vmatpush.msra.mxu0 %v69
    %498 = vmatmul.f32.gmra.mxu0 %v480
    %v499 = vpop.f32.mrf.mxu0
    %v500 = vadd.f32 %v79, %v499
    %501 = vdwg.mxu0
    %v502 = vadd.f32 %v475, %v500
    %v503 = vxor.u32 %v502, 2147483648
    %v504 = vmul.f32 %v503, 1.442695
    %v505 = vpow.pop %v504
    %v506 = vadd.f32 %v505, 1.0
    %v507 = vrcp.pop %v506
    %v508 = vmul.f32 %v506, %v507
    %v509 = vsub.f32 1.0, %v508
    %v510 = vmul.f32 %v507, %v509
    %v511 = vadd.f32 %v507, %v510
    %vm512 = vweird.f32 %v506
    %vm513 = vweird.f32 %v507
    %vm514 = vmor %vm512, %vm513
    %v515 = vsel %vm514, %v507, %v511
    %v516 = vand.u32 2147483647, %v506
    %vm517 = vcmp.eq.f32.partialorder %v516, 8.507059e+37
    %v518 = vand.u32 %v506, 2147483648
    %v519 = vor.u32 1.1754944e-38, %v518
    %v520 = vsel %vm517, %v519, %v515
    %v521 = vmul.f32 1.0, %v520
    %523 = vrot.lane.b32.xlu0 %v500, 64
    %v524 = vpop.permute.xlu0 %523
    %v526 = vmul.f32 %v521, %v524
    %528 = vrot.lane.b32.xlu0 %v526, 64
    %v529 = vpop.permute.xlu0 %528
    %v531 = vadd.f32 %v475, %v529
    %v532 = vtanh.pop %v531
    %v533 = vsub.f32 1.0, %v521
    %535 = vrot.lane.b32.xlu0 %v532, 96
    %v536 = vpop.permute.xlu0 %535
    %v538 = vmul.f32 %v533, %v536
    %v539 = vmul.f32 %v521, %v448
    %v540 = vadd.f32 %v538, %v539
    %v541 = vld [vmem:[%s0 + $0x5] sm:$0x1]
    %v542 = vld [vmem:[%s0 + $0xd] sm:$0x1]
    %v545 = vrot.slane %v542, 7
    %v546 = vsel %vm86, %v545, %v541
    %v547 = vsel %vm88, %v546, 0
    %549 = vmatpush.msra.mxu0 0.0
    %550 = vmatpush.msra.mxu0 0.0
    %551 = vmatpush.msra.mxu0 0.0
    %552 = vmatpush.msra.mxu0 0.0
    %553 = vmatpush.msra.mxu0 0.0
    %554 = vmatpush.msra.mxu0 0.0
    %555 = vmatpush.msra.mxu0 0.0
    %556 = vmatpush.msra.mxu0 0.0
    %557 = vmatpush.msra.mxu0 0.0
    %558 = vmatpush.msra.mxu0 0.0
    %559 = vmatpush.msra.mxu0 0.0
    %560 = vmatpush.msra.mxu0 0.0
    %561 = vmatpush.msra.mxu0 %v68
    %562 = vmatpush.msra.mxu0 %v67
    %563 = vmatpush.msra.mxu0 %v66
    %564 = vmatpush.msra.mxu0 %v65
    %565 = vmatmul.f32.gmra.mxu0 %v547
    %v566 = vpop.f32.mrf.mxu0
    %v567 = vadd.f32 %v75, %v566
    %568 = vdwg.mxu0
    %570 = vrot.lane.b32.xlu0 %v540, 96
    %v571 = vpop.permute.xlu0 %570
    %v572 = vsel %vm88, %v571, 0
    %574 = vmatpush.msra.mxu0 0.0
    %575 = vmatpush.msra.mxu0 0.0
    %576 = vmatpush.msra.mxu0 0.0
    %577 = vmatpush.msra.mxu0 0.0
    %578 = vmatpush.msra.mxu0 0.0
    %579 = vmatpush.msra.mxu0 0.0
    %580 = vmatpush.msra.mxu0 0.0
    %581 = vmatpush.msra.mxu0 0.0
    %582 = vmatpush.msra.mxu0 0.0
    %583 = vmatpush.msra.mxu0 0.0
    %584 = vmatpush.msra.mxu0 0.0
    %585 = vmatpush.msra.mxu0 0.0
    %586 = vmatpush.msra.mxu0 %v72
    %587 = vmatpush.msra.mxu0 %v71
    %588 = vmatpush.msra.mxu0 %v70
    %589 = vmatpush.msra.mxu0 %v69
    %590 = vmatmul.f32.gmra.mxu0 %v572
    %v591 = vpop.f32.mrf.mxu0
    %v592 = vadd.f32 %v79, %v591
    %593 = vdwg.mxu0
    %v594 = vadd.f32 %v567, %v592
    %v595 = vxor.u32 %v594, 2147483648
    %v596 = vmul.f32 %v595, 1.442695
    %v597 = vpow.pop %v596
    %v598 = vadd.f32 %v597, 1.0
    %v599 = vrcp.pop %v598
    %v600 = vmul.f32 %v598, %v599
    %v601 = vsub.f32 1.0, %v600
    %v602 = vmul.f32 %v599, %v601
    %v603 = vadd.f32 %v599, %v602
    %vm604 = vweird.f32 %v598
    %vm605 = vweird.f32 %v599
    %vm606 = vmor %vm604, %vm605
    %v607 = vsel %vm606, %v599, %v603
    %v608 = vand.u32 2147483647, %v598
    %vm609 = vcmp.eq.f32.partialorder %v608, 8.507059e+37
    %v610 = vand.u32 %v598, 2147483648
    %v611 = vor.u32 1.1754944e-38, %v610
    %v612 = vsel %vm609, %v611, %v607
    %v613 = vmul.f32 1.0, %v612
    %615 = vrot.lane.b32.xlu0 %v592, 64
    %v616 = vpop.permute.xlu0 %615
    %v618 = vmul.f32 %v613, %v616
    %620 = vrot.lane.b32.xlu0 %v618, 64
    %v621 = vpop.permute.xlu0 %620
    %v623 = vadd.f32 %v567, %v621
    %v624 = vtanh.pop %v623
    %v625 = vsub.f32 1.0, %v613
    %627 = vrot.lane.b32.xlu0 %v624, 96
    %v628 = vpop.permute.xlu0 %627
    %v630 = vmul.f32 %v625, %v628
    %v631 = vmul.f32 %v613, %v540
    %v632 = vadd.f32 %v630, %v631
    %v633 = vld [vmem:[%s0 + $0x6] sm:$0x1]
    %v634 = vld [vmem:[%s0 + $0xe] sm:$0x1]
    %v637 = vrot.slane %v634, 7
    %v638 = vsel %vm86, %v637, %v633
    %v639 = vsel %vm88, %v638, 0
    %641 = vmatpush.msra.mxu0 0.0
    %642 = vmatpush.msra.mxu0 0.0
    %643 = vmatpush.msra.mxu0 0.0
    %644 = vmatpush.msra.mxu0 0.0
    %645 = vmatpush.msra.mxu0 0.0
    %646 = vmatpush.msra.mxu0 0.0
    %647 = vmatpush.msra.mxu0 0.0
    %648 = vmatpush.msra.mxu0 0.0
    %649 = vmatpush.msra.mxu0 0.0
    %650 = vmatpush.msra.mxu0 0.0
    %651 = vmatpush.msra.mxu0 0.0
    %652 = vmatpush.msra.mxu0 0.0
    %653 = vmatpush.msra.mxu0 %v68
    %654 = vmatpush.msra.mxu0 %v67
    %655 = vmatpush.msra.mxu0 %v66
    %656 = vmatpush.msra.mxu0 %v65
    %657 = vmatmul.f32.gmra.mxu0 %v639
    %v658 = vpop.f32.mrf.mxu0
    %v659 = vadd.f32 %v75, %v658
    %660 = vdwg.mxu0
    %662 = vrot.lane.b32.xlu0 %v632, 96
    %v663 = vpop.permute.xlu0 %662
    %v664 = vsel %vm88, %v663, 0
    %666 = vmatpush.msra.mxu0 0.0
    %667 = vmatpush.msra.mxu0 0.0
    %668 = vmatpush.msra.mxu0 0.0
    %669 = vmatpush.msra.mxu0 0.0
    %670 = vmatpush.msra.mxu0 0.0
    %671 = vmatpush.msra.mxu0 0.0
    %672 = vmatpush.msra.mxu0 0.0
    %673 = vmatpush.msra.mxu0 0.0
    %674 = vmatpush.msra.mxu0 0.0
    %675 = vmatpush.msra.mxu0 0.0
    %676 = vmatpush.msra.mxu0 0.0
    %677 = vmatpush.msra.mxu0 0.0
    %678 = vmatpush.msra.mxu0 %v72
    %679 = vmatpush.msra.mxu0 %v71
    %680 = vmatpush.msra.mxu0 %v70
    %681 = vmatpush.msra.mxu0 %v69
    %682 = vmatmul.f32.gmra.mxu0 %v664
    %v683 = vpop.f32.mrf.mxu0
    %v684 = vadd.f32 %v79, %v683
    %685 = vdwg.mxu0
    %v686 = vadd.f32 %v659, %v684
    %v687 = vxor.u32 %v686, 2147483648
    %v688 = vmul.f32 %v687, 1.442695
    %v689 = vpow.pop %v688
    %v690 = vadd.f32 %v689, 1.0
    %v691 = vrcp.pop %v690
    %v692 = vmul.f32 %v690, %v691
    %v693 = vsub.f32 1.0, %v692
    %v694 = vmul.f32 %v691, %v693
    %v695 = vadd.f32 %v691, %v694
    %vm696 = vweird.f32 %v690
    %vm697 = vweird.f32 %v691
    %vm698 = vmor %vm696, %vm697
    %v699 = vsel %vm698, %v691, %v695
    %v700 = vand.u32 2147483647, %v690
    %vm701 = vcmp.eq.f32.partialorder %v700, 8.507059e+37
    %v702 = vand.u32 %v690, 2147483648
    %v703 = vor.u32 1.1754944e-38, %v702
    %v704 = vsel %vm701, %v703, %v699
    %v705 = vmul.f32 1.0, %v704
    %707 = vrot.lane.b32.xlu0 %v684, 64
    %v708 = vpop.permute.xlu0 %707
    %v710 = vmul.f32 %v705, %v708
    %712 = vrot.lane.b32.xlu0 %v710, 64
    %v713 = vpop.permute.xlu0 %712
    %v715 = vadd.f32 %v659, %v713
    %v716 = vtanh.pop %v715
    %v717 = vsub.f32 1.0, %v705
    %719 = vrot.lane.b32.xlu0 %v716, 96
    %v720 = vpop.permute.xlu0 %719
    %v722 = vmul.f32 %v717, %v720
    %v723 = vmul.f32 %v705, %v632
    %v724 = vadd.f32 %v722, %v723
    %v725 = vld [vmem:[%s0 + $0x7] sm:$0x1]
    %v726 = vld [vmem:[%s0 + $0xf] sm:$0x1]
    %v729 = vrot.slane %v726, 7
    %v730 = vsel %vm86, %v729, %v725
    %v731 = vsel %vm88, %v730, 0
    %733 = vmatpush.msra.mxu0 0.0
    %734 = vmatpush.msra.mxu0 0.0
    %735 = vmatpush.msra.mxu0 0.0
    %736 = vmatpush.msra.mxu0 0.0
    %737 = vmatpush.msra.mxu0 0.0
    %738 = vmatpush.msra.mxu0 0.0
    %739 = vmatpush.msra.mxu0 0.0
    %740 = vmatpush.msra.mxu0 0.0
    %741 = vmatpush.msra.mxu0 0.0
    %742 = vmatpush.msra.mxu0 0.0
    %743 = vmatpush.msra.mxu0 0.0
    %744 = vmatpush.msra.mxu0 0.0
    %745 = vmatpush.msra.mxu0 %v68
    %746 = vmatpush.msra.mxu0 %v67
    %747 = vmatpush.msra.mxu0 %v66
    %748 = vmatpush.msra.mxu0 %v65
    %749 = vmatmul.f32.gmra.mxu0 %v731
    %v750 = vpop.f32.mrf.mxu0
    %v751 = vadd.f32 %v75, %v750
    %752 = vdwg.mxu0
    %754 = vrot.lane.b32.xlu0 %v724, 96
    %v755 = vpop.permute.xlu0 %754
    %v756 = vsel %vm88, %v755, 0
    %758 = vmatpush.msra.mxu0 0.0
    %759 = vmatpush.msra.mxu0 0.0
    %760 = vmatpush.msra.mxu0 0.0
    %761 = vmatpush.msra.mxu0 0.0
    %762 = vmatpush.msra.mxu0 0.0
    %763 = vmatpush.msra.mxu0 0.0
    %764 = vmatpush.msra.mxu0 0.0
    %765 = vmatpush.msra.mxu0 0.0
    %766 = vmatpush.msra.mxu0 0.0
    %767 = vmatpush.msra.mxu0 0.0
    %768 = vmatpush.msra.mxu0 0.0
    %769 = vmatpush.msra.mxu0 0.0
    %770 = vmatpush.msra.mxu0 %v72
    %771 = vmatpush.msra.mxu0 %v71
    %772 = vmatpush.msra.mxu0 %v70
    %773 = vmatpush.msra.mxu0 %v69
    %774 = vmatmul.f32.gmra.mxu0 %v756
    %v775 = vpop.f32.mrf.mxu0
    %v776 = vadd.f32 %v79, %v775
    %777 = vdwg.mxu0
    %v778 = vadd.f32 %v751, %v776
    %v779 = vxor.u32 %v778, 2147483648
    %v780 = vmul.f32 %v779, 1.442695
    %v781 = vpow.pop %v780
    %v782 = vadd.f32 %v781, 1.0
    %v783 = vrcp.pop %v782
    %v784 = vmul.f32 %v782, %v783
    %v785 = vsub.f32 1.0, %v784
    %v786 = vmul.f32 %v783, %v785
    %v787 = vadd.f32 %v783, %v786
    %vm788 = vweird.f32 %v782
    %vm789 = vweird.f32 %v783
    %vm790 = vmor %vm788, %vm789
    %v791 = vsel %vm790, %v783, %v787
    %v792 = vand.u32 2147483647, %v782
    %vm793 = vcmp.eq.f32.partialorder %v792, 8.507059e+37
    %v794 = vand.u32 %v782, 2147483648
    %v795 = vor.u32 1.1754944e-38, %v794
    %v796 = vsel %vm793, %v795, %v791
    %v797 = vmul.f32 1.0, %v796
    %799 = vrot.lane.b32.xlu0 %v776, 64
    %v800 = vpop.permute.xlu0 %799
    %v802 = vmul.f32 %v797, %v800
    %804 = vrot.lane.b32.xlu0 %v802, 64
    %v805 = vpop.permute.xlu0 %804
    %v807 = vadd.f32 %v751, %v805
    %v808 = vtanh.pop %v807
    %v809 = vsub.f32 1.0, %v797
    %811 = vrot.lane.b32.xlu0 %v808, 96
    %v812 = vpop.permute.xlu0 %811
    %v814 = vmul.f32 %v809, %v812
    %v815 = vmul.f32 %v797, %v724
    %v816 = vadd.f32 %v814, %v815
    %v817 = vmax.f32 %v816, 0.0
    %v818 = vld [vmem:[#allocation5] sm:$0xff]
    %v819 = vld [vmem:[#allocation5 + $0x8] sm:$0xff]
    %v820 = vld [vmem:[#allocation5 + $0x10] sm:$0xff]
    %v821 = vld [vmem:[#allocation5 + $0x18] sm:$0xff]
    %v822 = vld [vmem:[%s6] sm:$0x1]
    %v824 = vperm.slane %v822, 0
    %827 = vrot.lane.b32.xlu0 %v817, 96
    %v828 = vpop.permute.xlu0 %827
    %v829 = vsel %vm88, %v828, 0
    %831 = vmatpush.msra.mxu0 0.0
    %832 = vmatpush.msra.mxu0 0.0
    %833 = vmatpush.msra.mxu0 0.0
    %834 = vmatpush.msra.mxu0 0.0
    %835 = vmatpush.msra.mxu0 0.0
    %836 = vmatpush.msra.mxu0 0.0
    %837 = vmatpush.msra.mxu0 0.0
    %838 = vmatpush.msra.mxu0 0.0
    %839 = vmatpush.msra.mxu0 0.0
    %840 = vmatpush.msra.mxu0 0.0
    %841 = vmatpush.msra.mxu0 0.0
    %842 = vmatpush.msra.mxu0 0.0
    %843 = vmatpush.msra.mxu0 %v821
    %844 = vmatpush.msra.mxu0 %v820
    %845 = vmatpush.msra.mxu0 %v819
    %846 = vmatpush.msra.mxu0 %v818
    %847 = vmatmul.f32.gmra.mxu0 %v829
    %v848 = vpop.f32.mrf.mxu0
    %v849 = vadd.f32 %v824, %v848
    %850 = vdwg.mxu0
    %v851 = vtanh.pop %v849
    %v852 = vld [vmem:[%s7] sm:$0xff]
    %v853 = vld [vmem:[%s7 + $0x8] sm:$0xff]
    %v854 = vld [vmem:[%s7 + $0x10] sm:$0xff]
    %v855 = vld [vmem:[%s7 + $0x18] sm:$0xff]
    %v856 = vld [vmem:[%s8] sm:$0x1]
    %v858 = vperm.slane %v856, 0
    %v861 = vsel %vm88, %v851, 0
    %863 = vmatpush.msra.mxu0 0.0
    %864 = vmatpush.msra.mxu0 0.0
    %865 = vmatpush.msra.mxu0 0.0
    %866 = vmatpush.msra.mxu0 0.0
    %867 = vmatpush.msra.mxu0 0.0
    %868 = vmatpush.msra.mxu0 0.0
    %869 = vmatpush.msra.mxu0 0.0
    %870 = vmatpush.msra.mxu0 0.0
    %871 = vmatpush.msra.mxu0 0.0
    %872 = vmatpush.msra.mxu0 0.0
    %873 = vmatpush.msra.mxu0 0.0
    %874 = vmatpush.msra.mxu0 0.0
    %875 = vmatpush.msra.mxu0 %v855
    %876 = vmatpush.msra.mxu0 %v854
    %877 = vmatpush.msra.mxu0 %v853
    %878 = vmatpush.msra.mxu0 %v852
    %879 = vmatmul.f32.gmra.mxu0 %v861
    %v880 = vpop.f32.mrf.mxu0
    %v881 = vadd.f32 %v858, %v880
    %882 = vdwg.mxu0
    %vm883 = vcmask 123904
    %884 = vst.msk [vmem:[#allocation7] sm:$0x3] %vm883, %v881
    // Predicated region
    $region46: #{tpu_custom_call.1} parent=1 // pred_check
      _
    $region47: #{tpu_custom_call.1} parent=1 // pred_check_branch
      %886 = sbr.rel (0) target = $region49
    $region48: #{tpu_custom_call.1} parent=1 // pred_region
      %888 = vsyncadd [#allocation4], 0
      %s890 = sshll.u32 [#allocation7], 4
      %s891 = int_to_ptr.vmem [resolvable:$true] %s890
      %s892 = sshll.u32 %s9, 4
      %s893 = int_to_ptr.hbm [resolvable:$true] %s892
      %895 = dma.vmem_to_hbm [thread:$0]  %s891, 32, %s893, [#allocation4]
    $region49: #{tpu_custom_call.1} parent=1 // pred_fallthru
      _
    // Predicated region
    $region50: #{tpu_custom_call.1} parent=1 // pred_check
      _
    $region51: #{tpu_custom_call.1} parent=1 // pred_check_branch
      %897 = sbr.rel (0) target = $region53
    $region52: #{tpu_custom_call.1} parent=1 // pred_region
      %899 = dma.done [#allocation4], 32
    $region53: #{tpu_custom_call.1} parent=1 // pred_fallthru
      _
    %900 = vsyncpa [#allocation3], 1
    %901 = vsyncpa [#allocation6], 1
    %902 = vsyncpa [#allocation4], 1

</llo_original>
